<compile_context>
chip_gen: v7x
topology: tpu7x:2x2x1
jax: 0.10.0
libtpu: 0.0.40
codegen_flags: <defaults>
</compile_context>

<pallas_src>
import jax
import jax.numpy as jnp
from jax.experimental import pallas as pl
from jax.experimental.pallas import tpu as pltpu

# ---------------- configuration (small, TPU-friendly sizes) ----------------
BATCH = 2
SEQ = 8                 # seq_length / n_set
N_IN = 4                # n_feat
N_EMB = 128             # n_embedding
DEC_HID = 2 * N_EMB     # decoder hidden width (256)
N_OUT = 2
N_OUT_PAD = 128         # lane-dense padded output width (sliced in wrapper)

BS = BATCH * SEQ        # flattened set rows (16)
FEAT_PAD = 128          # x feature dim zero-padded to one lane block

# rows of the packed (8, DEC_HID) f32 "misc" tensor
ROW_BE1, ROW_BE2, ROW_BE3, ROW_BD1, ROW_BD2, ROW_BD3, ROW_WD1LEN = range(7)
# columns of the packed (BATCH, 128) f32 "bpack" tensor
COL_LENS = BS           # column holding lens (decoder extra feature)
COL_INV = BS + 1        # column holding 1 / mask.sum()  (mean-pool scale)


def deepset_kernel(x_ref, wmid_ref, wdec_ref, misc_ref, bpack_ref, out_ref):
    misc = misc_ref[...]                       # (8, 2E) f32: biases + wd1len row
    bpack = bpack_ref[...]                     # (B, 128) f32: mask | lens | 1/cnt

    # ---- encoder MLP on flattened set rows: (B*S, 128pad) -> (B*S, E) ----
    x = x_ref[...]                             # bf16, features zero-padded
    h = jnp.dot(x, wmid_ref[:, 0:N_EMB], preferred_element_type=jnp.float32)
    h = jnp.maximum(h + misc[ROW_BE1:ROW_BE1 + 1, 0:N_EMB], 0.0)
    h = jnp.dot(h.astype(jnp.bfloat16), wmid_ref[:, N_EMB:2 * N_EMB],
                preferred_element_type=jnp.float32)
    h = jnp.maximum(h + misc[ROW_BE2:ROW_BE2 + 1, 0:N_EMB], 0.0)
    h = jnp.dot(h.astype(jnp.bfloat16), wmid_ref[:, 2 * N_EMB:3 * N_EMB],
                preferred_element_type=jnp.float32)
    h = h + misc[ROW_BE3:ROW_BE3 + 1, 0:N_EMB]                 # (B*S, E) f32

    # ---- masked mean-pool as one MXU matmul (block-diagonal 0/1 mask) ----
    mask = bpack[:, 0:BS]                      # (B, B*S) exact 0/1, f32
    lens = bpack[:, COL_LENS:COL_LENS + 1]     # (B, 1) lens feature
    inv_cnt = bpack[:, COL_INV:COL_INV + 1]    # (B, 1) == 1 / mask.sum(1)
    pooled = jnp.dot(mask, h, preferred_element_type=jnp.float32) * inv_cnt

    # ---- decoder MLP; the concatenated lens feature is folded in through
    #      its dedicated first-layer weight row (wd1len, kept in f32) ----
    d = jnp.dot(pooled.astype(jnp.bfloat16),
                wmid_ref[:, 3 * N_EMB:3 * N_EMB + DEC_HID],
                preferred_element_type=jnp.float32)
    d = d + lens * misc[ROW_WD1LEN:ROW_WD1LEN + 1, :] + misc[ROW_BD1:ROW_BD1 + 1, :]
    d = jnp.maximum(d, 0.0)
    d = jnp.dot(d.astype(jnp.bfloat16), wdec_ref[:, 0:DEC_HID],
                preferred_element_type=jnp.float32)
    d = jnp.maximum(d + misc[ROW_BD2:ROW_BD2 + 1, :], 0.0)
    out = jnp.dot(d.astype(jnp.bfloat16),
                  wdec_ref[:, DEC_HID:DEC_HID + N_OUT_PAD],
                  preferred_element_type=jnp.float32)
    out_ref[...] = out + misc[ROW_BD3:ROW_BD3 + 1, 0:N_OUT_PAD]  # (B, 128) f32


@jax.jit
def deepset_forward(x, lens, w_mid, w_dec, misc):
    """x: (BATCH, SEQ, N_IN) f32; lens: (BATCH,) int32; packed params."""
    # flatten + zero-pad features to a lane block; MXU operand in bf16
    x_flat = x.reshape(BS, N_IN)
    x_pad = jnp.zeros((BS, FEAT_PAD), jnp.float32).at[:, :N_IN].set(x_flat)
    x_pad = x_pad.astype(jnp.bfloat16)

    # per-batch pack: block-diagonal 0/1 mask over the flattened rows, the
    # lens feature, and the guarded mean-pool scale 1/mask.sum()
    col_batch = jnp.arange(BS) // SEQ
    col_seq = jnp.arange(BS) % SEQ
    pool = ((col_batch[None, :] == jnp.arange(BATCH)[:, None])
            & (col_seq[None, :] < lens[:, None])).astype(jnp.float32)  # (B, BS)
    counts = jnp.maximum(pool.sum(axis=1), 1.0)
    bpack = jnp.zeros((BATCH, 128), jnp.float32)
    bpack = bpack.at[:, :BS].set(pool)
    bpack = bpack.at[:, COL_LENS].set(lens.astype(jnp.float32))
    bpack = bpack.at[:, COL_INV].set(1.0 / counts)

    vmem = pl.BlockSpec(memory_space=pltpu.MemorySpace.VMEM)
    out = pl.pallas_call(
        deepset_kernel,
        out_shape=jax.ShapeDtypeStruct((BATCH, N_OUT_PAD), jnp.float32),
        in_specs=[vmem] * 5,
        out_specs=vmem,
    )(x_pad, w_mid, w_dec, misc, bpack)
    return out[:, :N_OUT]


def init_params(key):
    """Deterministic parameter init matching the module's layer shapes."""
    def linear(k, fan_in, fan_out):
        kw, kb = jax.random.split(k)
        bound = 1.0 / jnp.sqrt(fan_in)
        w = jax.random.uniform(kw, (fan_in, fan_out), jnp.float32, -bound, bound)
        b = jax.random.uniform(kb, (fan_out,), jnp.float32, -bound, bound)
        return w, b

    keys = jax.random.split(key, 6)
    p = {}
    p["we1"], p["be1"] = linear(keys[0], N_IN, N_EMB)        # enc layer 1
    p["we2"], p["be2"] = linear(keys[1], N_EMB, N_EMB)       # enc layer 2
    p["we3"], p["be3"] = linear(keys[2], N_EMB, N_EMB)       # enc layer 3
    # decoder first layer takes [pooled | lens]  (n_embedding + 1 inputs)
    p["wd1_full"], p["bd1"] = linear(keys[3], N_EMB + 1, DEC_HID)
    p["wd2"], p["bd2"] = linear(keys[4], DEC_HID, DEC_HID)
    p["wd3"], p["bd3"] = linear(keys[5], DEC_HID, N_OUT)
    return p


def pack_params(p):
    """Pack the 13 layer tensors into 3 kernel inputs (2 bf16 slabs + 1 f32)."""
    we1_pad = jnp.zeros((N_EMB, N_EMB), jnp.float32).at[:N_IN].set(p["we1"])
    wd1 = p["wd1_full"][:N_EMB]          # (E, 2E)  main decoder-1 weight
    wd1len = p["wd1_full"][N_EMB]        # (2E,)    weight row for the lens feature
    w_mid = jnp.concatenate([we1_pad, p["we2"], p["we3"], wd1],
                            axis=1).astype(jnp.bfloat16)           # (128, 640)

    wd3_pad = jnp.zeros((DEC_HID, N_OUT_PAD),
                        jnp.float32).at[:, :N_OUT].set(p["wd3"])
    w_dec = jnp.concatenate([p["wd2"], wd3_pad],
                            axis=1).astype(jnp.bfloat16)           # (256, 384)

    misc = jnp.zeros((8, DEC_HID), jnp.float32)                    # (8, 256)
    misc = misc.at[ROW_BE1, :N_EMB].set(p["be1"])
    misc = misc.at[ROW_BE2, :N_EMB].set(p["be2"])
    misc = misc.at[ROW_BE3, :N_EMB].set(p["be3"])
    misc = misc.at[ROW_BD1, :].set(p["bd1"])
    misc = misc.at[ROW_BD2, :].set(p["bd2"])
    misc = misc.at[ROW_BD3, :N_OUT].set(p["bd3"])
    misc = misc.at[ROW_WD1LEN, :].set(wd1len)
    return w_mid, w_dec, misc


def deepset_reference(x, lens, p):
    """Pure-JAX f32 reference of the module's forward pass."""
    x_flat = x.reshape(BS, N_IN)
    h = jax.nn.relu(x_flat @ p["we1"] + p["be1"])
    h = jax.nn.relu(h @ p["we2"] + p["be2"])
    h = (h @ p["we3"] + p["be3"]).reshape(BATCH, SEQ, N_EMB)
    mask = (jnp.arange(SEQ)[None, :] < lens[:, None]).astype(jnp.float32)
    pooled = (h * mask[:, :, None]).sum(1) / mask.sum(1, keepdims=True)
    feat = jnp.concatenate([pooled, lens[:, None].astype(jnp.float32)], axis=1)
    d = jax.nn.relu(feat @ p["wd1_full"] + p["bd1"])
    d = jax.nn.relu(d @ p["wd2"] + p["bd2"])
    return d @ p["wd3"] + p["bd3"]


if __name__ == "__main__":
    key = jax.random.PRNGKey(0)
    k_x, k_len, k_par = jax.random.split(key, 3)

    # x: (batch, n_set, n_feat) — same axis convention as the PyTorch module
    x = jax.random.normal(k_x, (BATCH, SEQ, N_IN), dtype=jnp.float32)
    # lens ~ randint(1, seq_length + 1); drawn host-side deterministically
    lens = jax.random.randint(k_len, (BATCH,), 1, SEQ + 1)

    params = init_params(k_par)
    w_mid, w_dec, misc = pack_params(params)

    out = deepset_forward(x, lens, w_mid, w_dec, misc)
    jax.block_until_ready(out)
    assert out.shape == (BATCH, N_OUT) and out.dtype == jnp.float32

    ref = deepset_reference(x, lens, params)
    assert jnp.allclose(out, ref, rtol=5e-2, atol=5e-2), (out, ref)
    print("KERNEL_OK")
</pallas_src>

<mosaic_0001>
module attributes {stable_mosaic.version = 11 : i64} {
  func.func @deepset_kernel(%arg0: memref<16x128xbf16, #tpu.memory_space<vmem>>, %arg1: memref<128x640xbf16, #tpu.memory_space<vmem>>, %arg2: memref<256x384xbf16, #tpu.memory_space<vmem>>, %arg3: memref<8x256xf32, #tpu.memory_space<vmem>>, %arg4: memref<2x128xf32, #tpu.memory_space<vmem>>, %arg5: memref<2x128xf32, #tpu.memory_space<vmem>>) attributes {dimension_semantics = [], scalar_prefetch = 0 : i64, scratch_operands = 0 : i64, tpu.core_type = #tpu.core_type<tc>} {
    %c0 = arith.constant 0 : index
    %c0_0 = arith.constant 0 : index
    %0 = vector.load %arg3[%c0, %c0_0] : memref<8x256xf32, #tpu.memory_space<vmem>>, vector<8x256xf32>
    %c0_1 = arith.constant 0 : index
    %c0_2 = arith.constant 0 : index
    %1 = vector.load %arg4[%c0_1, %c0_2] : memref<2x128xf32, #tpu.memory_space<vmem>>, vector<2x128xf32>
    %c0_3 = arith.constant 0 : index
    %c0_4 = arith.constant 0 : index
    %2 = vector.load %arg0[%c0_3, %c0_4] : memref<16x128xbf16, #tpu.memory_space<vmem>>, vector<16x128xbf16>
    %c0_5 = arith.constant 0 : index
    %c0_6 = arith.constant 0 : index
    %3 = vector.load %arg1[%c0_5, %c0_6] : memref<128x640xbf16, #tpu.memory_space<vmem>>, vector<128x128xbf16>
    %cst = arith.constant dense<0.000000e+00> : vector<16x128xf32>
    %4 = tpu.matmul %2, %3, %cst {dimension_numbers = #tpu.dot_dimension_numbers<[1], [0], [0], [1], [0, 0, 1, 1], [], []>} : vector<16x128xbf16>, vector<128x128xbf16>, vector<16x128xf32> -> vector<16x128xf32>
    %5 = vector.extract_strided_slice %0 {offsets = [0, 0], sizes = [1, 128], strides = [1, 1]} : vector<8x256xf32> to vector<1x128xf32>
    %6 = vector.broadcast %5 : vector<1x128xf32> to vector<16x128xf32>
    %7 = arith.addf %4, %6 : vector<16x128xf32>
    %cst_7 = arith.constant 0.000000e+00 : f32
    %8 = vector.broadcast %cst_7 : f32 to vector<16x128xf32>
    %9 = arith.maximumf %7, %8 : vector<16x128xf32>
    %10 = arith.truncf %9 : vector<16x128xf32> to vector<16x128xbf16>
    %c0_8 = arith.constant 0 : index
    %c128 = arith.constant 128 : index
    %11 = vector.load %arg1[%c0_8, %c128] : memref<128x640xbf16, #tpu.memory_space<vmem>>, vector<128x128xbf16>
    %cst_9 = arith.constant dense<0.000000e+00> : vector<16x128xf32>
    %12 = tpu.matmul %10, %11, %cst_9 {dimension_numbers = #tpu.dot_dimension_numbers<[1], [0], [0], [1], [0, 0, 1, 1], [], []>} : vector<16x128xbf16>, vector<128x128xbf16>, vector<16x128xf32> -> vector<16x128xf32>
    %13 = vector.extract_strided_slice %0 {offsets = [1, 0], sizes = [1, 128], strides = [1, 1]} : vector<8x256xf32> to vector<1x128xf32>
    %14 = vector.broadcast %13 : vector<1x128xf32> to vector<16x128xf32>
    %15 = arith.addf %12, %14 : vector<16x128xf32>
    %cst_10 = arith.constant 0.000000e+00 : f32
    %16 = vector.broadcast %cst_10 : f32 to vector<16x128xf32>
    %17 = arith.maximumf %15, %16 : vector<16x128xf32>
    %18 = arith.truncf %17 : vector<16x128xf32> to vector<16x128xbf16>
    %c0_11 = arith.constant 0 : index
    %c256 = arith.constant 256 : index
    %19 = vector.load %arg1[%c0_11, %c256] : memref<128x640xbf16, #tpu.memory_space<vmem>>, vector<128x128xbf16>
    %cst_12 = arith.constant dense<0.000000e+00> : vector<16x128xf32>
    %20 = tpu.matmul %18, %19, %cst_12 {dimension_numbers = #tpu.dot_dimension_numbers<[1], [0], [0], [1], [0, 0, 1, 1], [], []>} : vector<16x128xbf16>, vector<128x128xbf16>, vector<16x128xf32> -> vector<16x128xf32>
    %21 = vector.extract_strided_slice %0 {offsets = [2, 0], sizes = [1, 128], strides = [1, 1]} : vector<8x256xf32> to vector<1x128xf32>
    %22 = vector.broadcast %21 : vector<1x128xf32> to vector<16x128xf32>
    %23 = arith.addf %20, %22 : vector<16x128xf32>
    %24 = vector.extract_strided_slice %1 {offsets = [0, 0], sizes = [2, 16], strides = [1, 1]} : vector<2x128xf32> to vector<2x16xf32>
    %25 = vector.extract_strided_slice %1 {offsets = [0, 16], sizes = [2, 1], strides = [1, 1]} : vector<2x128xf32> to vector<2x1xf32>
    %26 = vector.extract_strided_slice %1 {offsets = [0, 17], sizes = [2, 1], strides = [1, 1]} : vector<2x128xf32> to vector<2x1xf32>
    %cst_13 = arith.constant dense<0.000000e+00> : vector<2x128xf32>
    %27 = tpu.matmul %24, %23, %cst_13 {dimension_numbers = #tpu.dot_dimension_numbers<[1], [0], [0], [1], [0, 0, 1, 1], [], []>} : vector<2x16xf32>, vector<16x128xf32>, vector<2x128xf32> -> vector<2x128xf32>
    %28 = vector.broadcast %26 : vector<2x1xf32> to vector<2x128xf32>
    %29 = arith.mulf %27, %28 : vector<2x128xf32>
    %30 = arith.truncf %29 : vector<2x128xf32> to vector<2x128xbf16>
    %c0_14 = arith.constant 0 : index
    %c384 = arith.constant 384 : index
    %31 = vector.load %arg1[%c0_14, %c384] : memref<128x640xbf16, #tpu.memory_space<vmem>>, vector<128x256xbf16>
    %cst_15 = arith.constant dense<0.000000e+00> : vector<2x256xf32>
    %32 = tpu.matmul %30, %31, %cst_15 {dimension_numbers = #tpu.dot_dimension_numbers<[1], [0], [0], [1], [0, 0, 1, 1], [], []>} : vector<2x128xbf16>, vector<128x256xbf16>, vector<2x256xf32> -> vector<2x256xf32>
    %33 = vector.extract_strided_slice %0 {offsets = [6, 0], sizes = [1, 256], strides = [1, 1]} : vector<8x256xf32> to vector<1x256xf32>
    %34 = vector.broadcast %25 : vector<2x1xf32> to vector<2x256xf32>
    %35 = vector.broadcast %33 : vector<1x256xf32> to vector<2x256xf32>
    %36 = arith.mulf %34, %35 : vector<2x256xf32>
    %37 = arith.addf %32, %36 : vector<2x256xf32>
    %38 = vector.extract_strided_slice %0 {offsets = [3, 0], sizes = [1, 256], strides = [1, 1]} : vector<8x256xf32> to vector<1x256xf32>
    %39 = vector.broadcast %38 : vector<1x256xf32> to vector<2x256xf32>
    %40 = arith.addf %37, %39 : vector<2x256xf32>
    %cst_16 = arith.constant 0.000000e+00 : f32
    %41 = vector.broadcast %cst_16 : f32 to vector<2x256xf32>
    %42 = arith.maximumf %40, %41 : vector<2x256xf32>
    %43 = arith.truncf %42 : vector<2x256xf32> to vector<2x256xbf16>
    %c0_17 = arith.constant 0 : index
    %c0_18 = arith.constant 0 : index
    %44 = vector.load %arg2[%c0_17, %c0_18] : memref<256x384xbf16, #tpu.memory_space<vmem>>, vector<256x256xbf16>
    %cst_19 = arith.constant dense<0.000000e+00> : vector<2x256xf32>
    %45 = tpu.matmul %43, %44, %cst_19 {dimension_numbers = #tpu.dot_dimension_numbers<[1], [0], [0], [1], [0, 0, 1, 1], [], []>} : vector<2x256xbf16>, vector<256x256xbf16>, vector<2x256xf32> -> vector<2x256xf32>
    %46 = vector.extract_strided_slice %0 {offsets = [4, 0], sizes = [1, 256], strides = [1, 1]} : vector<8x256xf32> to vector<1x256xf32>
    %47 = vector.broadcast %46 : vector<1x256xf32> to vector<2x256xf32>
    %48 = arith.addf %45, %47 : vector<2x256xf32>
    %cst_20 = arith.constant 0.000000e+00 : f32
    %49 = vector.broadcast %cst_20 : f32 to vector<2x256xf32>
    %50 = arith.maximumf %48, %49 : vector<2x256xf32>
    %51 = arith.truncf %50 : vector<2x256xf32> to vector<2x256xbf16>
    %c0_21 = arith.constant 0 : index
    %c256_22 = arith.constant 256 : index
    %52 = vector.load %arg2[%c0_21, %c256_22] : memref<256x384xbf16, #tpu.memory_space<vmem>>, vector<256x128xbf16>
    %cst_23 = arith.constant dense<0.000000e+00> : vector<2x128xf32>
    %53 = tpu.matmul %51, %52, %cst_23 {dimension_numbers = #tpu.dot_dimension_numbers<[1], [0], [0], [1], [0, 0, 1, 1], [], []>} : vector<2x256xbf16>, vector<256x128xbf16>, vector<2x128xf32> -> vector<2x128xf32>
    %54 = vector.extract_strided_slice %0 {offsets = [5, 0], sizes = [1, 128], strides = [1, 1]} : vector<8x256xf32> to vector<1x128xf32>
    %55 = vector.broadcast %54 : vector<1x128xf32> to vector<2x128xf32>
    %56 = arith.addf %53, %55 : vector<2x128xf32>
    %c0_24 = arith.constant 0 : index
    %c0_25 = arith.constant 0 : index
    %57 = vector.load %arg5[%c0_24, %c0_25] : memref<2x128xf32, #tpu.memory_space<vmem>>, vector<2x128xf32>
    tpu.vector_store %arg5[%c0_24, %c0_25], %56 {strides = array<i32>} : memref<2x128xf32, #tpu.memory_space<vmem>>, vector<2x128xf32>,
    return
  }
}

</mosaic_0001>

<llo_original>
// kernel: deepset_forward.1
$region0: #{deepset_forward.1}
  #allocation0 [shape = 'u32[]', space=smem, size = 0x4, offset = 0x4, fixed_abs, tag = 'smem constant byte address 0x4 - core index']
  #allocation1 [shape = 'u32[144,128]{1,0:T(1,128)}', space=vmem, size = 0x12000, scoped, tag = 'internal scratch']
  %s0 = inlined_call_operand.vmem [shape: bf16[16,128], index: 0, kind: input, shape index: {}]
  %s1 = inlined_call_operand.hbm [shape: bf16[128,640], index: 1, kind: input, shape index: {}]
  %s2 = inlined_call_operand.hbm [shape: bf16[256,384], index: 2, kind: input, shape index: {}]
  %s3 = inlined_call_operand.vmem [shape: f32[8,256], index: 3, kind: input, shape index: {}]
  %s4 = inlined_call_operand.vmem [shape: f32[2,128], index: 4, kind: input, shape index: {}]
  %s5 = inlined_call_operand.hbm [shape: f32[2,128], index: 5, kind: output, shape index: {}]
  %s6 = sld [smem:[#allocation0]]
  $region38: #{deepset_forward.1} parent=0
    _
  %s8 = ssub.s32 1, %s6
  %s9 = scalar_select 0, %s8, %s6
  $region1: #{deepset_forward.1} parent=0
    #allocation2 [shape = 'u8[163840]{0}', space=vmem, size = 0x28000, scoped, tag = 'input window, operand 1, single buffered']
    #allocation3 [shape = 's32[1]{0}', space=sflag, size = 0x4, scoped, tag = 'scoped memory for deepset_forward.1']
    #allocation4 [shape = 's32[1]{0}', space=sflag, size = 0x4, scoped, tag = 'scoped memory for deepset_forward.1']
    #allocation5 [shape = 'u8[196608]{0}', space=vmem, size = 0x30000, scoped, tag = 'input window, operand 2, single buffered']
    #allocation6 [shape = 's32[1]{0}', space=sflag, size = 0x4, scoped, tag = 'scoped memory for deepset_forward.1']
    #allocation7 [shape = 'u8[1024]{0}', space=vmem, size = 0x400, scoped, tag = 'output window, operand 0, single buffered']
    %10 = vsyncpa [#allocation3], 0
    %11 = vsyncpa [#allocation6], 0
    %12 = vsyncpa [#allocation4], 0
    // Predicated region
    $region2: #{deepset_forward.1} parent=1 // pred_check
      _
    $region3: #{deepset_forward.1} parent=1 // pred_check_branch
      %14 = sbr.rel (0) target = $region5
    $region4: #{deepset_forward.1} parent=1 // pred_region
      _
    $region5: #{deepset_forward.1} parent=1 // pred_fallthru
      _
    // Predicated region
    $region6: #{deepset_forward.1} parent=1 // pred_check
      _
    $region7: #{deepset_forward.1} parent=1 // pred_check_branch
      %16 = sbr.rel (0) target = $region9
    $region8: #{deepset_forward.1} parent=1 // pred_region
      %s18 = ssub.s32 5120, 5120
      %19 = vsyncadd [#allocation3], %s18
      %s20 = sshll.u32 [#allocation2], 4
      %s21 = int_to_ptr.vmem [resolvable:$true] %s20
      %26 = dma.hbm_to_vmem [thread:$0]  %s1, 5120, %s21, [#allocation3], 320, 320, 20
    $region9: #{deepset_forward.1} parent=1 // pred_fallthru
      _
    // Predicated region
    $region10: #{deepset_forward.1} parent=1 // pred_check
      _
    $region11: #{deepset_forward.1} parent=1 // pred_check_branch
      %28 = sbr.rel (0) target = $region13
    $region12: #{deepset_forward.1} parent=1 // pred_region
      %s30 = ssub.s32 6144, 6144
      %31 = vsyncadd [#allocation6], %s30
      %s32 = sshll.u32 [#allocation5], 4
      %s33 = int_to_ptr.vmem [resolvable:$true] %s32
      %38 = dma.hbm_to_vmem [thread:$0]  %s2, 6144, %s33, [#allocation6], 192, 192, 12
    $region13: #{deepset_forward.1} parent=1 // pred_fallthru
      _
    // Predicated region
    $region14: #{deepset_forward.1} parent=1 // pred_check
      _
    $region15: #{deepset_forward.1} parent=1 // pred_check_branch
      %40 = sbr.rel (0) target = $region17
    $region16: #{deepset_forward.1} parent=1 // pred_region
      _
    $region17: #{deepset_forward.1} parent=1 // pred_fallthru
      _
    // Predicated region
    $region18: #{deepset_forward.1} parent=1 // pred_check
      _
    $region19: #{deepset_forward.1} parent=1 // pred_check_branch
      %42 = sbr.rel (0) target = $region21
    $region20: #{deepset_forward.1} parent=1 // pred_region
      _
    $region21: #{deepset_forward.1} parent=1 // pred_fallthru
      _
    // Predicated region
    $region22: #{deepset_forward.1} parent=1 // pred_check
      _
    $region23: #{deepset_forward.1} parent=1 // pred_check_branch
      %44 = sbr.rel (0) target = $region25
    $region24: #{deepset_forward.1} parent=1 // pred_region
      %45 = dma.done [#allocation3], 5120
    $region25: #{deepset_forward.1} parent=1 // pred_fallthru
      _
    // Predicated region
    $region26: #{deepset_forward.1} parent=1 // pred_check
      _
    $region27: #{deepset_forward.1} parent=1 // pred_check_branch
      %47 = sbr.rel (0) target = $region29
    $region28: #{deepset_forward.1} parent=1 // pred_region
      %48 = dma.done [#allocation6], 6144
    $region29: #{deepset_forward.1} parent=1 // pred_fallthru
      _
    %v50 = vld [vmem:[%s3] sm:$0xff]
    %v51 = vld [vmem:[%s3 + $0x8] sm:$0xff]
    %v52 = vld [vmem:[%s4] sm:$0x3]
    %v53 = vld [vmem:[%s0] sm:$0xf]
    %v54 = vld [vmem:[%s0 + $0x4] sm:$0xf]
    %v55 = vld [vmem:[#allocation2] sm:$0xf]
    %v56 = vld [vmem:[#allocation2 + $0x14] sm:$0xf]
    %v57 = vld [vmem:[#allocation2 + $0x28] sm:$0xf]
    %v58 = vld [vmem:[#allocation2 + $0x3c] sm:$0xf]
    %v59 = vld [vmem:[#allocation2 + $0x50] sm:$0xf]
    %v60 = vld [vmem:[#allocation2 + $0x64] sm:$0xf]
    %v61 = vld [vmem:[#allocation2 + $0x78] sm:$0xf]
    %v62 = vld [vmem:[#allocation2 + $0x8c] sm:$0xf]
    %v63 = vld [vmem:[#allocation2 + $0xa0] sm:$0xf]
    %v64 = vld [vmem:[#allocation2 + $0xb4] sm:$0xf]
    %v65 = vld [vmem:[#allocation2 + $0xc8] sm:$0xf]
    %v66 = vld [vmem:[#allocation2 + $0xdc] sm:$0xf]
    %v67 = vld [vmem:[#allocation2 + $0xf0] sm:$0xf]
    %v68 = vld [vmem:[#allocation2 + $0x104] sm:$0xf]
    %v69 = vld [vmem:[#allocation2 + $0x118] sm:$0xf]
    %v70 = vld [vmem:[#allocation2 + $0x12c] sm:$0xf]
    %v71 = vlaneseq
    %v72 = vshrl.u32 %v71, 7
    %v73 = vsub.s32 0, %v72
    %v74 = vrot.slane %v50, %v73
    %v77 = vunpack.c.l.b16 %v53
    %v78 = vunpack.c.l.b16 %v54
    %v79 = vpack.c.b16 %v78, %v77
    %v97 = vunpack.c.l.b16 %v55
    %v98 = vunpack.c.l.b16 %v56
    %v99 = vunpack.c.l.b16 %v57
    %v100 = vunpack.c.l.b16 %v58
    %v101 = vunpack.c.l.b16 %v59
    %v102 = vunpack.c.l.b16 %v60
    %v103 = vunpack.c.l.b16 %v61
    %v104 = vunpack.c.l.b16 %v62
    %v105 = vunpack.c.l.b16 %v63
    %v106 = vunpack.c.l.b16 %v64
    %v107 = vunpack.c.l.b16 %v65
    %v108 = vunpack.c.l.b16 %v66
    %v109 = vunpack.c.l.b16 %v67
    %v110 = vunpack.c.l.b16 %v68
    %v111 = vunpack.c.l.b16 %v69
    %v112 = vunpack.c.l.b16 %v70
    %v113 = vpack.c.b16 %v98, %v97
    %v114 = vpack.c.b16 %v100, %v99
    %v115 = vpack.c.b16 %v102, %v101
    %v116 = vpack.c.b16 %v104, %v103
    %v117 = vpack.c.b16 %v106, %v105
    %v118 = vpack.c.b16 %v108, %v107
    %v119 = vpack.c.b16 %v110, %v109
    %v120 = vpack.c.b16 %v112, %v111
    %129 = vmatprep.subr.bf16.mxu0 0
    %130 = vmatpush1.bf16.msra.mxu0 %v113
    %131 = vmatprep.subr.bf16.mxu0 0
    %132 = vmatpush1.bf16.msra.mxu0 %v114
    %133 = vmatprep.subr.bf16.mxu0 0
    %134 = vmatpush1.bf16.msra.mxu0 %v115
    %135 = vmatprep.subr.bf16.mxu0 0
    %136 = vmatpush1.bf16.msra.mxu0 %v116
    %137 = vmatprep.subr.bf16.mxu0 0
    %138 = vmatpush1.bf16.msra.mxu0 %v117
    %139 = vmatprep.subr.bf16.mxu0 0
    %140 = vmatpush1.bf16.msra.mxu0 %v118
    %141 = vmatprep.subr.bf16.mxu0 0
    %142 = vmatpush1.bf16.msra.mxu0 %v119
    %143 = vmatprep.subr.bf16.mxu0 0
    %144 = vmatpush1.bf16.msra.mxu0 %v120
    %145 = vmatprep.subr.bf16.mxu0 0
    %146 = vmatpush1.bf16.msra.mxu0 0
    %147 = vmatprep.subr.bf16.mxu0 0
    %148 = vmatpush1.bf16.msra.mxu0 0
    %149 = vmatprep.subr.bf16.mxu0 0
    %150 = vmatpush1.bf16.msra.mxu0 0
    %151 = vmatprep.subr.bf16.mxu0 0
    %152 = vmatpush1.bf16.msra.mxu0 0
    %153 = vmatprep.subr.bf16.mxu0 0
    %154 = vmatpush1.bf16.msra.mxu0 0
    %155 = vmatprep.subr.bf16.mxu0 0
    %156 = vmatpush1.bf16.msra.mxu0 0
    %157 = vmatprep.subr.bf16.mxu0 0
    %158 = vmatpush1.bf16.msra.mxu0 0
    %159 = vmatprep.subr.bf16.mxu0 0
    %160 = vmatpush1.bf16.msra.mxu0 0
    %161 = vmatprep.mubr.bf16.mxu0 0
    %162 = vmatmul.mubr.bf16.gmra.mrb[0].mxu0 %v79
    %v163 = vpop.f32.mrb[0].mxu0
    %v164 = vadd.f32 %v74, %v163
    %v165 = vpop.f32.mrb[0].mxu0
    %v166 = vpop.f32.mrb[0].mxu0
    %v167 = vadd.f32 %v74, %v166
    %v168 = vpop.f32.mrb[0].mxu0
    %169 = vdwg.mxu0
    %v170 = vmax.f32 %v164, 0.0
    %v171 = vmax.f32 %v167, 0.0
    %v172 = vpack.c.bf16 %v171, %v170
    %v173 = vld [vmem:[#allocation2 + $0x4] sm:$0xf]
    %v174 = vld [vmem:[#allocation2 + $0x18] sm:$0xf]
    %v175 = vld [vmem:[#allocation2 + $0x2c] sm:$0xf]
    %v176 = vld [vmem:[#allocation2 + $0x40] sm:$0xf]
    %v177 = vld [vmem:[#allocation2 + $0x54] sm:$0xf]
    %v178 = vld [vmem:[#allocation2 + $0x68] sm:$0xf]
    %v179 = vld [vmem:[#allocation2 + $0x7c] sm:$0xf]
    %v180 = vld [vmem:[#allocation2 + $0x90] sm:$0xf]
    %v181 = vld [vmem:[#allocation2 + $0xa4] sm:$0xf]
    %v182 = vld [vmem:[#allocation2 + $0xb8] sm:$0xf]
    %v183 = vld [vmem:[#allocation2 + $0xcc] sm:$0xf]
    %v184 = vld [vmem:[#allocation2 + $0xe0] sm:$0xf]
    %v185 = vld [vmem:[#allocation2 + $0xf4] sm:$0xf]
    %v186 = vld [vmem:[#allocation2 + $0x108] sm:$0xf]
    %v187 = vld [vmem:[#allocation2 + $0x11c] sm:$0xf]
    %v188 = vld [vmem:[#allocation2 + $0x130] sm:$0xf]
    %v189 = vlaneseq
    %v190 = vshrl.u32 %v189, 7
    %v191 = vsub.s32 1, %v190
    %v192 = vrot.slane %v50, %v191
    %v209 = vunpack.c.l.b16 %v173
    %v210 = vunpack.c.l.b16 %v174
    %v211 = vunpack.c.l.b16 %v175
    %v212 = vunpack.c.l.b16 %v176
    %v213 = vunpack.c.l.b16 %v177
    %v214 = vunpack.c.l.b16 %v178
    %v215 = vunpack.c.l.b16 %v179
    %v216 = vunpack.c.l.b16 %v180
    %v217 = vunpack.c.l.b16 %v181
    %v218 = vunpack.c.l.b16 %v182
    %v219 = vunpack.c.l.b16 %v183
    %v220 = vunpack.c.l.b16 %v184
    %v221 = vunpack.c.l.b16 %v185
    %v222 = vunpack.c.l.b16 %v186
    %v223 = vunpack.c.l.b16 %v187
    %v224 = vunpack.c.l.b16 %v188
    %v225 = vpack.c.b16 %v210, %v209
    %v226 = vpack.c.b16 %v212, %v211
    %v227 = vpack.c.b16 %v214, %v213
    %v228 = vpack.c.b16 %v216, %v215
    %v229 = vpack.c.b16 %v218, %v217
    %v230 = vpack.c.b16 %v220, %v219
    %v231 = vpack.c.b16 %v222, %v221
    %v232 = vpack.c.b16 %v224, %v223
    %241 = vmatprep.subr.bf16.mxu0 0
    %242 = vmatpush1.bf16.msra.mxu0 %v225
    %243 = vmatprep.subr.bf16.mxu0 0
    %244 = vmatpush1.bf16.msra.mxu0 %v226
    %245 = vmatprep.subr.bf16.mxu0 0
    %246 = vmatpush1.bf16.msra.mxu0 %v227
    %247 = vmatprep.subr.bf16.mxu0 0
    %248 = vmatpush1.bf16.msra.mxu0 %v228
    %249 = vmatprep.subr.bf16.mxu0 0
    %250 = vmatpush1.bf16.msra.mxu0 %v229
    %251 = vmatprep.subr.bf16.mxu0 0
    %252 = vmatpush1.bf16.msra.mxu0 %v230
    %253 = vmatprep.subr.bf16.mxu0 0
    %254 = vmatpush1.bf16.msra.mxu0 %v231
    %255 = vmatprep.subr.bf16.mxu0 0
    %256 = vmatpush1.bf16.msra.mxu0 %v232
    %257 = vmatprep.subr.bf16.mxu0 0
    %258 = vmatpush1.bf16.msra.mxu0 0
    %259 = vmatprep.subr.bf16.mxu0 0
    %260 = vmatpush1.bf16.msra.mxu0 0
    %261 = vmatprep.subr.bf16.mxu0 0
    %262 = vmatpush1.bf16.msra.mxu0 0
    %263 = vmatprep.subr.bf16.mxu0 0
    %264 = vmatpush1.bf16.msra.mxu0 0
    %265 = vmatprep.subr.bf16.mxu0 0
    %266 = vmatpush1.bf16.msra.mxu0 0
    %267 = vmatprep.subr.bf16.mxu0 0
    %268 = vmatpush1.bf16.msra.mxu0 0
    %269 = vmatprep.subr.bf16.mxu0 0
    %270 = vmatpush1.bf16.msra.mxu0 0
    %271 = vmatprep.subr.bf16.mxu0 0
    %272 = vmatpush1.bf16.msra.mxu0 0
    %273 = vmatprep.mubr.bf16.mxu0 0
    %274 = vmatmul.mubr.bf16.gmra.mrb[0].mxu0 %v172
    %v275 = vpop.f32.mrb[0].mxu0
    %v276 = vadd.f32 %v192, %v275
    %v277 = vpop.f32.mrb[0].mxu0
    %v278 = vpop.f32.mrb[0].mxu0
    %v279 = vadd.f32 %v192, %v278
    %v280 = vpop.f32.mrb[0].mxu0
    %281 = vdwg.mxu0
    %v282 = vmax.f32 %v276, 0.0
    %v283 = vmax.f32 %v279, 0.0
    %v284 = vpack.c.bf16 %v283, %v282
    %v285 = vld [vmem:[#allocation2 + $0x8] sm:$0xf]
    %v286 = vld [vmem:[#allocation2 + $0x1c] sm:$0xf]
    %v287 = vld [vmem:[#allocation2 + $0x30] sm:$0xf]
    %v288 = vld [vmem:[#allocation2 + $0x44] sm:$0xf]
    %v289 = vld [vmem:[#allocation2 + $0x58] sm:$0xf]
    %v290 = vld [vmem:[#allocation2 + $0x6c] sm:$0xf]
    %v291 = vld [vmem:[#allocation2 + $0x80] sm:$0xf]
    %v292 = vld [vmem:[#allocation2 + $0x94] sm:$0xf]
    %v293 = vld [vmem:[#allocation2 + $0xa8] sm:$0xf]
    %v294 = vld [vmem:[#allocation2 + $0xbc] sm:$0xf]
    %v295 = vld [vmem:[#allocation2 + $0xd0] sm:$0xf]
    %v296 = vld [vmem:[#allocation2 + $0xe4] sm:$0xf]
    %v297 = vld [vmem:[#allocation2 + $0xf8] sm:$0xf]
    %v298 = vld [vmem:[#allocation2 + $0x10c] sm:$0xf]
    %v299 = vld [vmem:[#allocation2 + $0x120] sm:$0xf]
    %v300 = vld [vmem:[#allocation2 + $0x134] sm:$0xf]
    %v301 = vlaneseq
    %v302 = vshrl.u32 %v301, 7
    %v303 = vsub.s32 2, %v302
    %v304 = vrot.slane %v50, %v303
    %v321 = vunpack.c.l.b16 %v285
    %v322 = vunpack.c.l.b16 %v286
    %v323 = vunpack.c.l.b16 %v287
    %v324 = vunpack.c.l.b16 %v288
    %v325 = vunpack.c.l.b16 %v289
    %v326 = vunpack.c.l.b16 %v290
    %v327 = vunpack.c.l.b16 %v291
    %v328 = vunpack.c.l.b16 %v292
    %v329 = vunpack.c.l.b16 %v293
    %v330 = vunpack.c.l.b16 %v294
    %v331 = vunpack.c.l.b16 %v295
    %v332 = vunpack.c.l.b16 %v296
    %v333 = vunpack.c.l.b16 %v297
    %v334 = vunpack.c.l.b16 %v298
    %v335 = vunpack.c.l.b16 %v299
    %v336 = vunpack.c.l.b16 %v300
    %v337 = vpack.c.b16 %v322, %v321
    %v338 = vpack.c.b16 %v324, %v323
    %v339 = vpack.c.b16 %v326, %v325
    %v340 = vpack.c.b16 %v328, %v327
    %v341 = vpack.c.b16 %v330, %v329
    %v342 = vpack.c.b16 %v332, %v331
    %v343 = vpack.c.b16 %v334, %v333
    %v344 = vpack.c.b16 %v336, %v335
    %353 = vmatprep.subr.bf16.mxu0 0
    %354 = vmatpush1.bf16.msra.mxu0 %v337
    %355 = vmatprep.subr.bf16.mxu0 0
    %356 = vmatpush1.bf16.msra.mxu0 %v338
    %357 = vmatprep.subr.bf16.mxu0 0
    %358 = vmatpush1.bf16.msra.mxu0 %v339
    %359 = vmatprep.subr.bf16.mxu0 0
    %360 = vmatpush1.bf16.msra.mxu0 %v340
    %361 = vmatprep.subr.bf16.mxu0 0
    %362 = vmatpush1.bf16.msra.mxu0 %v341
    %363 = vmatprep.subr.bf16.mxu0 0
    %364 = vmatpush1.bf16.msra.mxu0 %v342
    %365 = vmatprep.subr.bf16.mxu0 0
    %366 = vmatpush1.bf16.msra.mxu0 %v343
    %367 = vmatprep.subr.bf16.mxu0 0
    %368 = vmatpush1.bf16.msra.mxu0 %v344
    %369 = vmatprep.subr.bf16.mxu0 0
    %370 = vmatpush1.bf16.msra.mxu0 0
    %371 = vmatprep.subr.bf16.mxu0 0
    %372 = vmatpush1.bf16.msra.mxu0 0
    %373 = vmatprep.subr.bf16.mxu0 0
    %374 = vmatpush1.bf16.msra.mxu0 0
    %375 = vmatprep.subr.bf16.mxu0 0
    %376 = vmatpush1.bf16.msra.mxu0 0
    %377 = vmatprep.subr.bf16.mxu0 0
    %378 = vmatpush1.bf16.msra.mxu0 0
    %379 = vmatprep.subr.bf16.mxu0 0
    %380 = vmatpush1.bf16.msra.mxu0 0
    %381 = vmatprep.subr.bf16.mxu0 0
    %382 = vmatpush1.bf16.msra.mxu0 0
    %383 = vmatprep.subr.bf16.mxu0 0
    %384 = vmatpush1.bf16.msra.mxu0 0
    %385 = vmatprep.mubr.bf16.mxu0 0
    %386 = vmatmul.mubr.bf16.gmra.mrb[0].mxu0 %v284
    %v387 = vpop.f32.mrb[0].mxu0
    %v388 = vadd.f32 %v304, %v387
    %v389 = vpop.f32.mrb[0].mxu0
    %v390 = vpop.f32.mrb[0].mxu0
    %v391 = vadd.f32 %v304, %v390
    %v392 = vpop.f32.mrb[0].mxu0
    %393 = vdwg.mxu0
    %vm394 = vcmask 130048
    %v396 = vsel %vm394, %v52, 0
    %398 = vmatprep.subr.mxu0 0.0
    %399 = vmatpush1.msra.mxu0 %v388
    %400 = vmatprep.subr.mxu0 0.0
    %401 = vmatpush1.msra.mxu0 %v391
    %402 = vmatprep.subr.mxu0 0.0
    %403 = vmatpush1.msra.mxu0 0.0
    %404 = vmatprep.subr.mxu0 0.0
    %405 = vmatpush1.msra.mxu0 0.0
    %406 = vmatprep.subr.mxu0 0.0
    %407 = vmatpush1.msra.mxu0 0.0
    %408 = vmatprep.subr.mxu0 0.0
    %409 = vmatpush1.msra.mxu0 0.0
    %410 = vmatprep.subr.mxu0 0.0
    %411 = vmatpush1.msra.mxu0 0.0
    %412 = vmatprep.subr.mxu0 0.0
    %413 = vmatpush1.msra.mxu0 0.0
    %414 = vmatprep.subr.mxu0 0.0
    %415 = vmatpush1.msra.mxu0 0.0
    %416 = vmatprep.subr.mxu0 0.0
    %417 = vmatpush1.msra.mxu0 0.0
    %418 = vmatprep.subr.mxu0 0.0
    %419 = vmatpush1.msra.mxu0 0.0
    %420 = vmatprep.subr.mxu0 0.0
    %421 = vmatpush1.msra.mxu0 0.0
    %422 = vmatprep.subr.mxu0 0.0
    %423 = vmatpush1.msra.mxu0 0.0
    %424 = vmatprep.subr.mxu0 0.0
    %425 = vmatpush1.msra.mxu0 0.0
    %426 = vmatprep.subr.mxu0 0.0
    %427 = vmatpush1.msra.mxu0 0.0
    %428 = vmatprep.subr.mxu0 0.0
    %429 = vmatpush1.msra.mxu0 0.0
    %430 = vmatprep.subr.mxu0 0.0
    %431 = vmatpush1.msra.mxu0 0.0
    %432 = vmatprep.subr.mxu0 0.0
    %433 = vmatpush1.msra.mxu0 0.0
    %434 = vmatprep.subr.mxu0 0.0
    %435 = vmatpush1.msra.mxu0 0.0
    %436 = vmatprep.subr.mxu0 0.0
    %437 = vmatpush1.msra.mxu0 0.0
    %438 = vmatprep.subr.mxu0 0.0
    %439 = vmatpush1.msra.mxu0 0.0
    %440 = vmatprep.subr.mxu0 0.0
    %441 = vmatpush1.msra.mxu0 0.0
    %442 = vmatprep.subr.mxu0 0.0
    %443 = vmatpush1.msra.mxu0 0.0
    %444 = vmatprep.subr.mxu0 0.0
    %445 = vmatpush1.msra.mxu0 0.0
    %446 = vmatprep.subr.mxu0 0.0
    %447 = vmatpush1.msra.mxu0 0.0
    %448 = vmatprep.subr.mxu0 0.0
    %449 = vmatpush1.msra.mxu0 0.0
    %450 = vmatprep.subr.mxu0 0.0
    %451 = vmatpush1.msra.mxu0 0.0
    %452 = vmatprep.subr.mxu0 0.0
    %453 = vmatpush1.msra.mxu0 0.0
    %454 = vmatprep.subr.mxu0 0.0
    %455 = vmatpush1.msra.mxu0 0.0
    %456 = vmatprep.subr.mxu0 0.0
    %457 = vmatpush1.msra.mxu0 0.0
    %458 = vmatprep.subr.mxu0 0.0
    %459 = vmatpush1.msra.mxu0 0.0
    %460 = vmatprep.subr.mxu0 0.0
    %461 = vmatpush1.msra.mxu0 0.0
    %462 = vmatprep.mubr.f32.mxu0 0.0
    %463 = vmatmul.mubr.f32.gmra.mrb[0].mxu0 %v396
    %v464 = vpop.f32.mrb[0].mxu0
    %v465 = vadd.f32 0.0, %v464
    %v466 = vpop.f32.mrb[0].mxu0
    %467 = vdwg.mxu0
    %468 = vset.pattern.permute.xlu0 17
    %469 = vperm.xlu0 %468, %v52
    %v470 = vpop.permute.xlu0 %469
    %v472 = vmul.f32 %v465, %v470
    %v473 = vpack.c.bf16 %v472, %v472
    %v474 = vld [vmem:[#allocation2 + $0xc] sm:$0xff]
    %v475 = vld [vmem:[#allocation2 + $0x20] sm:$0xff]
    %v476 = vld [vmem:[#allocation2 + $0x34] sm:$0xff]
    %v477 = vld [vmem:[#allocation2 + $0x48] sm:$0xff]
    %v478 = vld [vmem:[#allocation2 + $0x5c] sm:$0xff]
    %v479 = vld [vmem:[#allocation2 + $0x70] sm:$0xff]
    %v480 = vld [vmem:[#allocation2 + $0x84] sm:$0xff]
    %v481 = vld [vmem:[#allocation2 + $0x98] sm:$0xff]
    %v482 = vld [vmem:[#allocation2 + $0xac] sm:$0xff]
    %v483 = vld [vmem:[#allocation2 + $0xc0] sm:$0xff]
    %v484 = vld [vmem:[#allocation2 + $0xd4] sm:$0xff]
    %v485 = vld [vmem:[#allocation2 + $0xe8] sm:$0xff]
    %v486 = vld [vmem:[#allocation2 + $0xfc] sm:$0xff]
    %v487 = vld [vmem:[#allocation2 + $0x110] sm:$0xff]
    %v488 = vld [vmem:[#allocation2 + $0x124] sm:$0xff]
    %v489 = vld [vmem:[#allocation2 + $0x138] sm:$0xff]
    %490 = vset.pattern.permute.xlu0 16
    %491 = vperm.xlu0 %490, %v52
    %v492 = vpop.permute.xlu0 %491
    %v494 = vlaneseq
    %v495 = vshrl.u32 %v494, 7
    %v496 = vsub.s32 6, %v495
    %v497 = vrot.slane %v50, %v496
    %v498 = vlaneseq
    %v499 = vshrl.u32 %v498, 7
    %v500 = vsub.s32 6, %v499
    %v501 = vrot.slane %v51, %v500
    %v502 = vmul.f32 %v492, %v497
    %v503 = vmul.f32 %v492, %v501
    %v520 = vunpack.c.l.b16 %v474
    %v521 = vunpack.c.h.b16 %v474
    %v522 = vunpack.c.l.b16 %v475
    %v523 = vunpack.c.h.b16 %v475
    %v524 = vunpack.c.l.b16 %v476
    %v525 = vunpack.c.h.b16 %v476
    %v526 = vunpack.c.l.b16 %v477
    %v527 = vunpack.c.h.b16 %v477
    %v528 = vunpack.c.l.b16 %v478
    %v529 = vunpack.c.h.b16 %v478
    %v530 = vunpack.c.l.b16 %v479
    %v531 = vunpack.c.h.b16 %v479
    %v532 = vunpack.c.l.b16 %v480
    %v533 = vunpack.c.h.b16 %v480
    %v534 = vunpack.c.l.b16 %v481
    %v535 = vunpack.c.h.b16 %v481
    %v536 = vunpack.c.l.b16 %v482
    %v537 = vunpack.c.h.b16 %v482
    %v538 = vunpack.c.l.b16 %v483
    %v539 = vunpack.c.h.b16 %v483
    %v540 = vunpack.c.l.b16 %v484
    %v541 = vunpack.c.h.b16 %v484
    %v542 = vunpack.c.l.b16 %v485
    %v543 = vunpack.c.h.b16 %v485
    %v544 = vunpack.c.l.b16 %v486
    %v545 = vunpack.c.h.b16 %v486
    %v546 = vunpack.c.l.b16 %v487
    %v547 = vunpack.c.h.b16 %v487
    %v548 = vunpack.c.l.b16 %v488
    %v549 = vunpack.c.h.b16 %v488
    %v550 = vunpack.c.l.b16 %v489
    %v551 = vunpack.c.h.b16 %v489
    %v552 = vpack.c.b16 %v522, %v520
    %v553 = vpack.c.b16 %v523, %v521
    %v554 = vpack.c.b16 %v526, %v524
    %v555 = vpack.c.b16 %v527, %v525
    %v556 = vpack.c.b16 %v530, %v528
    %v557 = vpack.c.b16 %v531, %v529
    %v558 = vpack.c.b16 %v534, %v532
    %v559 = vpack.c.b16 %v535, %v533
    %v560 = vpack.c.b16 %v538, %v536
    %v561 = vpack.c.b16 %v539, %v537
    %v562 = vpack.c.b16 %v542, %v540
    %v563 = vpack.c.b16 %v543, %v541
    %v564 = vpack.c.b16 %v546, %v544
    %v565 = vpack.c.b16 %v547, %v545
    %v566 = vpack.c.b16 %v550, %v548
    %v567 = vpack.c.b16 %v551, %v549
    %584 = vmatprep.subr.bf16.mxu0 %v553
    %585 = vmatpush1.bf16.msra.mxu0 %v552
    %586 = vmatprep.subr.bf16.mxu0 %v555
    %587 = vmatpush1.bf16.msra.mxu0 %v554
    %588 = vmatprep.subr.bf16.mxu0 %v557
    %589 = vmatpush1.bf16.msra.mxu0 %v556
    %590 = vmatprep.subr.bf16.mxu0 %v559
    %591 = vmatpush1.bf16.msra.mxu0 %v558
    %592 = vmatprep.subr.bf16.mxu0 %v561
    %593 = vmatpush1.bf16.msra.mxu0 %v560
    %594 = vmatprep.subr.bf16.mxu0 %v563
    %595 = vmatpush1.bf16.msra.mxu0 %v562
    %596 = vmatprep.subr.bf16.mxu0 %v565
    %597 = vmatpush1.bf16.msra.mxu0 %v564
    %598 = vmatprep.subr.bf16.mxu0 %v567
    %599 = vmatpush1.bf16.msra.mxu0 %v566
    %600 = vmatprep.subr.bf16.mxu0 0
    %601 = vmatpush1.bf16.msra.mxu0 0
    %602 = vmatprep.subr.bf16.mxu0 0
    %603 = vmatpush1.bf16.msra.mxu0 0
    %604 = vmatprep.subr.bf16.mxu0 0
    %605 = vmatpush1.bf16.msra.mxu0 0
    %606 = vmatprep.subr.bf16.mxu0 0
    %607 = vmatpush1.bf16.msra.mxu0 0
    %608 = vmatprep.subr.bf16.mxu0 0
    %609 = vmatpush1.bf16.msra.mxu0 0
    %610 = vmatprep.subr.bf16.mxu0 0
    %611 = vmatpush1.bf16.msra.mxu0 0
    %612 = vmatprep.subr.bf16.mxu0 0
    %613 = vmatpush1.bf16.msra.mxu0 0
    %614 = vmatprep.subr.bf16.mxu0 0
    %615 = vmatpush1.bf16.msra.mxu0 0
    %616 = vmatprep.mubr.bf16.mxu0 0
    %617 = vmatmul.mubr.bf16.gmra.mrb[0].mxu0 %v473
    %v618 = vpop.f32.mrb[0].mxu0
    %v619 = vadd.f32 %v502, %v618
    %v620 = vpop.f32.mrb[0].mxu0
    %v621 = vadd.f32 %v503, %v620
    %v622 = vpop.f32.mrb[0].mxu0
    %v623 = vpop.f32.mrb[0].mxu0
    %624 = vdwg.mxu0
    %v625 = vlaneseq
    %v626 = vshrl.u32 %v625, 7
    %v627 = vsub.s32 3, %v626
    %v628 = vrot.slane %v50, %v627
    %v629 = vlaneseq
    %v630 = vshrl.u32 %v629, 7
    %v631 = vsub.s32 3, %v630
    %v632 = vrot.slane %v51, %v631
    %v633 = vadd.f32 %v619, %v628
    %v634 = vadd.f32 %v621, %v632
    %v635 = vmax.f32 %v633, 0.0
    %v636 = vmax.f32 %v634, 0.0
    %v637 = vpack.c.bf16 %v635, %v635
    %v638 = vpack.c.bf16 %v636, %v636
    %v639 = vld [vmem:[#allocation5] sm:$0xff]
    %v640 = vld [vmem:[#allocation5 + $0xc] sm:$0xff]
    %v641 = vld [vmem:[#allocation5 + $0x18] sm:$0xff]
    %v642 = vld [vmem:[#allocation5 + $0x24] sm:$0xff]
    %v643 = vld [vmem:[#allocation5 + $0x30] sm:$0xff]
    %v644 = vld [vmem:[#allocation5 + $0x3c] sm:$0xff]
    %v645 = vld [vmem:[#allocation5 + $0x48] sm:$0xff]
    %v646 = vld [vmem:[#allocation5 + $0x54] sm:$0xff]
    %v647 = vld [vmem:[#allocation5 + $0x60] sm:$0xff]
    %v648 = vld [vmem:[#allocation5 + $0x6c] sm:$0xff]
    %v649 = vld [vmem:[#allocation5 + $0x78] sm:$0xff]
    %v650 = vld [vmem:[#allocation5 + $0x84] sm:$0xff]
    %v651 = vld [vmem:[#allocation5 + $0x90] sm:$0xff]
    %v652 = vld [vmem:[#allocation5 + $0x9c] sm:$0xff]
    %v653 = vld [vmem:[#allocation5 + $0xa8] sm:$0xff]
    %v654 = vld [vmem:[#allocation5 + $0xb4] sm:$0xff]
    %v655 = vld [vmem:[#allocation5 + $0xc0] sm:$0xff]
    %v656 = vld [vmem:[#allocation5 + $0xcc] sm:$0xff]
    %v657 = vld [vmem:[#allocation5 + $0xd8] sm:$0xff]
    %v658 = vld [vmem:[#allocation5 + $0xe4] sm:$0xff]
    %v659 = vld [vmem:[#allocation5 + $0xf0] sm:$0xff]
    %v660 = vld [vmem:[#allocation5 + $0xfc] sm:$0xff]
    %v661 = vld [vmem:[#allocation5 + $0x108] sm:$0xff]
    %v662 = vld [vmem:[#allocation5 + $0x114] sm:$0xff]
    %v663 = vld [vmem:[#allocation5 + $0x120] sm:$0xff]
    %v664 = vld [vmem:[#allocation5 + $0x12c] sm:$0xff]
    %v665 = vld [vmem:[#allocation5 + $0x138] sm:$0xff]
    %v666 = vld [vmem:[#allocation5 + $0x144] sm:$0xff]
    %v667 = vld [vmem:[#allocation5 + $0x150] sm:$0xff]
    %v668 = vld [vmem:[#allocation5 + $0x15c] sm:$0xff]
    %v669 = vld [vmem:[#allocation5 + $0x168] sm:$0xff]
    %v670 = vld [vmem:[#allocation5 + $0x174] sm:$0xff]
    %v671 = vlaneseq
    %v672 = vshrl.u32 %v671, 7
    %v673 = vsub.s32 4, %v672
    %v674 = vrot.slane %v50, %v673
    %v675 = vlaneseq
    %v676 = vshrl.u32 %v675, 7
    %v677 = vsub.s32 4, %v676
    %v678 = vrot.slane %v51, %v677
    %v711 = vunpack.c.l.b16 %v639
    %v712 = vunpack.c.h.b16 %v639
    %v713 = vunpack.c.l.b16 %v640
    %v714 = vunpack.c.h.b16 %v640
    %v715 = vunpack.c.l.b16 %v641
    %v716 = vunpack.c.h.b16 %v641
    %v717 = vunpack.c.l.b16 %v642
    %v718 = vunpack.c.h.b16 %v642
    %v719 = vunpack.c.l.b16 %v643
    %v720 = vunpack.c.h.b16 %v643
    %v721 = vunpack.c.l.b16 %v644
    %v722 = vunpack.c.h.b16 %v644
    %v723 = vunpack.c.l.b16 %v645
    %v724 = vunpack.c.h.b16 %v645
    %v725 = vunpack.c.l.b16 %v646
    %v726 = vunpack.c.h.b16 %v646
    %v727 = vunpack.c.l.b16 %v647
    %v728 = vunpack.c.h.b16 %v647
    %v729 = vunpack.c.l.b16 %v648
    %v730 = vunpack.c.h.b16 %v648
    %v731 = vunpack.c.l.b16 %v649
    %v732 = vunpack.c.h.b16 %v649
    %v733 = vunpack.c.l.b16 %v650
    %v734 = vunpack.c.h.b16 %v650
    %v735 = vunpack.c.l.b16 %v651
    %v736 = vunpack.c.h.b16 %v651
    %v737 = vunpack.c.l.b16 %v652
    %v738 = vunpack.c.h.b16 %v652
    %v739 = vunpack.c.l.b16 %v653
    %v740 = vunpack.c.h.b16 %v653
    %v741 = vunpack.c.l.b16 %v654
    %v742 = vunpack.c.h.b16 %v654
    %v743 = vunpack.c.l.b16 %v655
    %v744 = vunpack.c.h.b16 %v655
    %v745 = vunpack.c.l.b16 %v656
    %v746 = vunpack.c.h.b16 %v656
    %v747 = vunpack.c.l.b16 %v657
    %v748 = vunpack.c.h.b16 %v657
    %v749 = vunpack.c.l.b16 %v658
    %v750 = vunpack.c.h.b16 %v658
    %v751 = vunpack.c.l.b16 %v659
    %v752 = vunpack.c.h.b16 %v659
    %v753 = vunpack.c.l.b16 %v660
    %v754 = vunpack.c.h.b16 %v660
    %v755 = vunpack.c.l.b16 %v661
    %v756 = vunpack.c.h.b16 %v661
    %v757 = vunpack.c.l.b16 %v662
    %v758 = vunpack.c.h.b16 %v662
    %v759 = vunpack.c.l.b16 %v663
    %v760 = vunpack.c.h.b16 %v663
    %v761 = vunpack.c.l.b16 %v664
    %v762 = vunpack.c.h.b16 %v664
    %v763 = vunpack.c.l.b16 %v665
    %v764 = vunpack.c.h.b16 %v665
    %v765 = vunpack.c.l.b16 %v666
    %v766 = vunpack.c.h.b16 %v666
    %v767 = vunpack.c.l.b16 %v667
    %v768 = vunpack.c.h.b16 %v667
    %v769 = vunpack.c.l.b16 %v668
    %v770 = vunpack.c.h.b16 %v668
    %v771 = vunpack.c.l.b16 %v669
    %v772 = vunpack.c.h.b16 %v669
    %v773 = vunpack.c.l.b16 %v670
    %v774 = vunpack.c.h.b16 %v670
    %v775 = vpack.c.b16 %v713, %v711
    %v776 = vpack.c.b16 %v714, %v712
    %v777 = vpack.c.b16 %v717, %v715
    %v778 = vpack.c.b16 %v718, %v716
    %v779 = vpack.c.b16 %v721, %v719
    %v780 = vpack.c.b16 %v722, %v720
    %v781 = vpack.c.b16 %v725, %v723
    %v782 = vpack.c.b16 %v726, %v724
    %v783 = vpack.c.b16 %v729, %v727
    %v784 = vpack.c.b16 %v730, %v728
    %v785 = vpack.c.b16 %v733, %v731
    %v786 = vpack.c.b16 %v734, %v732
    %v787 = vpack.c.b16 %v737, %v735
    %v788 = vpack.c.b16 %v738, %v736
    %v789 = vpack.c.b16 %v741, %v739
    %v790 = vpack.c.b16 %v742, %v740
    %v791 = vpack.c.b16 %v745, %v743
    %v792 = vpack.c.b16 %v746, %v744
    %v793 = vpack.c.b16 %v749, %v747
    %v794 = vpack.c.b16 %v750, %v748
    %v795 = vpack.c.b16 %v753, %v751
    %v796 = vpack.c.b16 %v754, %v752
    %v797 = vpack.c.b16 %v757, %v755
    %v798 = vpack.c.b16 %v758, %v756
    %v799 = vpack.c.b16 %v761, %v759
    %v800 = vpack.c.b16 %v762, %v760
    %v801 = vpack.c.b16 %v765, %v763
    %v802 = vpack.c.b16 %v766, %v764
    %v803 = vpack.c.b16 %v769, %v767
    %v804 = vpack.c.b16 %v770, %v768
    %v805 = vpack.c.b16 %v773, %v771
    %v806 = vpack.c.b16 %v774, %v772
    %839 = vmatprep.subr.bf16.mxu0 %v776
    %840 = vmatpush1.bf16.msra.mxu0 %v775
    %841 = vmatprep.subr.bf16.mxu0 %v778
    %842 = vmatpush1.bf16.msra.mxu0 %v777
    %843 = vmatprep.subr.bf16.mxu0 %v780
    %844 = vmatpush1.bf16.msra.mxu0 %v779
    %845 = vmatprep.subr.bf16.mxu0 %v782
    %846 = vmatpush1.bf16.msra.mxu0 %v781
    %847 = vmatprep.subr.bf16.mxu0 %v784
    %848 = vmatpush1.bf16.msra.mxu0 %v783
    %849 = vmatprep.subr.bf16.mxu0 %v786
    %850 = vmatpush1.bf16.msra.mxu0 %v785
    %851 = vmatprep.subr.bf16.mxu0 %v788
    %852 = vmatpush1.bf16.msra.mxu0 %v787
    %853 = vmatprep.subr.bf16.mxu0 %v790
    %854 = vmatpush1.bf16.msra.mxu0 %v789
    %855 = vmatprep.subr.bf16.mxu0 %v792
    %856 = vmatpush1.bf16.msra.mxu0 %v791
    %857 = vmatprep.subr.bf16.mxu0 %v794
    %858 = vmatpush1.bf16.msra.mxu0 %v793
    %859 = vmatprep.subr.bf16.mxu0 %v796
    %860 = vmatpush1.bf16.msra.mxu0 %v795
    %861 = vmatprep.subr.bf16.mxu0 %v798
    %862 = vmatpush1.bf16.msra.mxu0 %v797
    %863 = vmatprep.subr.bf16.mxu0 %v800
    %864 = vmatpush1.bf16.msra.mxu0 %v799
    %865 = vmatprep.subr.bf16.mxu0 %v802
    %866 = vmatpush1.bf16.msra.mxu0 %v801
    %867 = vmatprep.subr.bf16.mxu0 %v804
    %868 = vmatpush1.bf16.msra.mxu0 %v803
    %869 = vmatprep.subr.bf16.mxu0 %v806
    %870 = vmatpush1.bf16.msra.mxu0 %v805
    %871 = vmatprep.mubr.bf16.mxu0 %v638
    %872 = vmatmul.mubr.bf16.gmra.mrb[0].mxu0 %v637
    %v873 = vpop.f32.mrb[0].mxu0
    %v874 = vadd.f32 %v674, %v873
    %v875 = vpop.f32.mrb[0].mxu0
    %v876 = vadd.f32 %v678, %v875
    %v877 = vpop.f32.mrb[0].mxu0
    %v878 = vpop.f32.mrb[0].mxu0
    %879 = vdwg.mxu0
    %v880 = vmax.f32 %v874, 0.0
    %v881 = vmax.f32 %v876, 0.0
    %v882 = vpack.c.bf16 %v880, %v880
    %v883 = vpack.c.bf16 %v881, %v881
    %v884 = vld [vmem:[#allocation5 + $0x8] sm:$0xf]
    %v885 = vld [vmem:[#allocation5 + $0x14] sm:$0xf]
    %v886 = vld [vmem:[#allocation5 + $0x20] sm:$0xf]
    %v887 = vld [vmem:[#allocation5 + $0x2c] sm:$0xf]
    %v888 = vld [vmem:[#allocation5 + $0x38] sm:$0xf]
    %v889 = vld [vmem:[#allocation5 + $0x44] sm:$0xf]
    %v890 = vld [vmem:[#allocation5 + $0x50] sm:$0xf]
    %v891 = vld [vmem:[#allocation5 + $0x5c] sm:$0xf]
    %v892 = vld [vmem:[#allocation5 + $0x68] sm:$0xf]
    %v893 = vld [vmem:[#allocation5 + $0x74] sm:$0xf]
    %v894 = vld [vmem:[#allocation5 + $0x80] sm:$0xf]
    %v895 = vld [vmem:[#allocation5 + $0x8c] sm:$0xf]
    %v896 = vld [vmem:[#allocation5 + $0x98] sm:$0xf]
    %v897 = vld [vmem:[#allocation5 + $0xa4] sm:$0xf]
    %v898 = vld [vmem:[#allocation5 + $0xb0] sm:$0xf]
    %v899 = vld [vmem:[#allocation5 + $0xbc] sm:$0xf]
    %v900 = vld [vmem:[#allocation5 + $0xc8] sm:$0xf]
    %v901 = vld [vmem:[#allocation5 + $0xd4] sm:$0xf]
    %v902 = vld [vmem:[#allocation5 + $0xe0] sm:$0xf]
    %v903 = vld [vmem:[#allocation5 + $0xec] sm:$0xf]
    %v904 = vld [vmem:[#allocation5 + $0xf8] sm:$0xf]
    %v905 = vld [vmem:[#allocation5 + $0x104] sm:$0xf]
    %v906 = vld [vmem:[#allocation5 + $0x110] sm:$0xf]
    %v907 = vld [vmem:[#allocation5 + $0x11c] sm:$0xf]
    %v908 = vld [vmem:[#allocation5 + $0x128] sm:$0xf]
    %v909 = vld [vmem:[#allocation5 + $0x134] sm:$0xf]
    %v910 = vld [vmem:[#allocation5 + $0x140] sm:$0xf]
    %v911 = vld [vmem:[#allocation5 + $0x14c] sm:$0xf]
    %v912 = vld [vmem:[#allocation5 + $0x158] sm:$0xf]
    %v913 = vld [vmem:[#allocation5 + $0x164] sm:$0xf]
    %v914 = vld [vmem:[#allocation5 + $0x170] sm:$0xf]
    %v915 = vld [vmem:[#allocation5 + $0x17c] sm:$0xf]
    %v916 = vlaneseq
    %v917 = vshrl.u32 %v916, 7
    %v918 = vsub.s32 5, %v917
    %v919 = vrot.slane %v50, %v918
    %v952 = vunpack.c.l.b16 %v884
    %v953 = vunpack.c.l.b16 %v885
    %v954 = vunpack.c.l.b16 %v886
    %v955 = vunpack.c.l.b16 %v887
    %v956 = vunpack.c.l.b16 %v888
    %v957 = vunpack.c.l.b16 %v889
    %v958 = vunpack.c.l.b16 %v890
    %v959 = vunpack.c.l.b16 %v891
    %v960 = vunpack.c.l.b16 %v892
    %v961 = vunpack.c.l.b16 %v893
    %v962 = vunpack.c.l.b16 %v894
    %v963 = vunpack.c.l.b16 %v895
    %v964 = vunpack.c.l.b16 %v896
    %v965 = vunpack.c.l.b16 %v897
    %v966 = vunpack.c.l.b16 %v898
    %v967 = vunpack.c.l.b16 %v899
    %v968 = vunpack.c.l.b16 %v900
    %v969 = vunpack.c.l.b16 %v901
    %v970 = vunpack.c.l.b16 %v902
    %v971 = vunpack.c.l.b16 %v903
    %v972 = vunpack.c.l.b16 %v904
    %v973 = vunpack.c.l.b16 %v905
    %v974 = vunpack.c.l.b16 %v906
    %v975 = vunpack.c.l.b16 %v907
    %v976 = vunpack.c.l.b16 %v908
    %v977 = vunpack.c.l.b16 %v909
    %v978 = vunpack.c.l.b16 %v910
    %v979 = vunpack.c.l.b16 %v911
    %v980 = vunpack.c.l.b16 %v912
    %v981 = vunpack.c.l.b16 %v913
    %v982 = vunpack.c.l.b16 %v914
    %v983 = vunpack.c.l.b16 %v915
    %v984 = vpack.c.b16 %v953, %v952
    %v985 = vpack.c.b16 %v955, %v954
    %v986 = vpack.c.b16 %v957, %v956
    %v987 = vpack.c.b16 %v959, %v958
    %v988 = vpack.c.b16 %v961, %v960
    %v989 = vpack.c.b16 %v963, %v962
    %v990 = vpack.c.b16 %v965, %v964
    %v991 = vpack.c.b16 %v967, %v966
    %v992 = vpack.c.b16 %v969, %v968
    %v993 = vpack.c.b16 %v971, %v970
    %v994 = vpack.c.b16 %v973, %v972
    %v995 = vpack.c.b16 %v975, %v974
    %v996 = vpack.c.b16 %v977, %v976
    %v997 = vpack.c.b16 %v979, %v978
    %v998 = vpack.c.b16 %v981, %v980
    %v999 = vpack.c.b16 %v983, %v982
    %1016 = vmatprep.subr.bf16.mxu0 0
    %1017 = vmatpush1.bf16.msra.mxu0 %v984
    %1018 = vmatprep.subr.bf16.mxu0 0
    %1019 = vmatpush1.bf16.msra.mxu0 %v985
    %1020 = vmatprep.subr.bf16.mxu0 0
    %1021 = vmatpush1.bf16.msra.mxu0 %v986
    %1022 = vmatprep.subr.bf16.mxu0 0
    %1023 = vmatpush1.bf16.msra.mxu0 %v987
    %1024 = vmatprep.subr.bf16.mxu0 0
    %1025 = vmatpush1.bf16.msra.mxu0 %v988
    %1026 = vmatprep.subr.bf16.mxu0 0
    %1027 = vmatpush1.bf16.msra.mxu0 %v989
    %1028 = vmatprep.subr.bf16.mxu0 0
    %1029 = vmatpush1.bf16.msra.mxu0 %v990
    %1030 = vmatprep.subr.bf16.mxu0 0
    %1031 = vmatpush1.bf16.msra.mxu0 %v991
    %1032 = vmatprep.subr.bf16.mxu0 0
    %1033 = vmatpush1.bf16.msra.mxu0 %v992
    %1034 = vmatprep.subr.bf16.mxu0 0
    %1035 = vmatpush1.bf16.msra.mxu0 %v993
    %1036 = vmatprep.subr.bf16.mxu0 0
    %1037 = vmatpush1.bf16.msra.mxu0 %v994
    %1038 = vmatprep.subr.bf16.mxu0 0
    %1039 = vmatpush1.bf16.msra.mxu0 %v995
    %1040 = vmatprep.subr.bf16.mxu0 0
    %1041 = vmatpush1.bf16.msra.mxu0 %v996
    %1042 = vmatprep.subr.bf16.mxu0 0
    %1043 = vmatpush1.bf16.msra.mxu0 %v997
    %1044 = vmatprep.subr.bf16.mxu0 0
    %1045 = vmatpush1.bf16.msra.mxu0 %v998
    %1046 = vmatprep.subr.bf16.mxu0 0
    %1047 = vmatpush1.bf16.msra.mxu0 %v999
    %1048 = vmatprep.mubr.bf16.mxu0 %v883
    %1049 = vmatmul.mubr.bf16.gmra.mrb[0].mxu0 %v882
    %v1050 = vpop.f32.mrb[0].mxu0
    %v1051 = vadd.f32 %v919, %v1050
    %v1052 = vpop.f32.mrb[0].mxu0
    %v1053 = vpop.f32.mrb[0].mxu0
    %v1054 = vpop.f32.mrb[0].mxu0
    %1055 = vdwg.mxu0
    %1056 = vst [vmem:[#allocation7] sm:$0x3] %v1051
    // Predicated region
    $region30: #{deepset_forward.1} parent=1 // pred_check
      _
    $region31: #{deepset_forward.1} parent=1 // pred_check_branch
      %1058 = sbr.rel (0) target = $region33
    $region32: #{deepset_forward.1} parent=1 // pred_region
      %s1060 = ssub.s32 32, 32
      %1061 = vsyncadd [#allocation4], %s1060
      %s1063 = sshll.u32 [#allocation7], 4
      %s1064 = int_to_ptr.vmem [resolvable:$true] %s1063
      %1066 = dma.vmem_to_hbm [thread:$0]  %s1064, 32, %s5, [#allocation4]
    $region33: #{deepset_forward.1} parent=1 // pred_fallthru
      _
    // Predicated region
    $region34: #{deepset_forward.1} parent=1 // pred_check
      _
    $region35: #{deepset_forward.1} parent=1 // pred_check_branch
      %1068 = sbr.rel (0) target = $region37
    $region36: #{deepset_forward.1} parent=1 // pred_region
      %1069 = dma.done [#allocation4], 32
    $region37: #{deepset_forward.1} parent=1 // pred_fallthru
      _
    %1070 = vsyncpa [#allocation3], 1
    %1071 = vsyncpa [#allocation6], 1
    %1072 = vsyncpa [#allocation4], 1

</llo_original>
